<compile_context>
chip_gen: v5e
topology: v5e:2x2
jax: 0.10.0
libtpu: 0.0.40
codegen_flags: <defaults>
</compile_context>

<pallas_src>
import functools

import jax
import jax.numpy as jnp
from jax.experimental import pallas as pl
from jax.experimental.pallas import tpu as pltpu


def _round_up(x: int, m: int) -> int:
    return ((x + m - 1) // m) * m


def _pick_tile(dim_pad: int, cap: int, align: int) -> int:
    """Largest multiple of `align` that divides `dim_pad` and is <= cap."""
    best = align
    t = align
    limit = min(cap, dim_pad)
    while t <= limit:
        if dim_pad % t == 0:
            best = t
        t += align
    return best


def _linear_kernel(x_ref, wt_ref, o_ref, *, precision):
    # x_ref : (tm, tk) activation tile
    # wt_ref: (tk, tn) tile of the pre-transposed weight (IN, OUT)
    # o_ref : (tm, tn) f32 output tile; its block index is constant across the
    #         K grid axis so it stays resident in VMEM -> accumulate directly
    #         into it (no scratch accumulator, no final copy).
    @pl.when(pl.program_id(2) == 0)
    def _init():
        o_ref[...] = jnp.zeros_like(o_ref)

    o_ref[...] += jnp.dot(
        x_ref[...],
        wt_ref[...],
        preferred_element_type=jnp.float32,
        precision=precision,
    )


def _pallas_matmul(x_p, w_t_p, *, tm, tn, tk, precision):
    m_pad, k_pad = x_p.shape
    k_pad2, n_pad = w_t_p.shape
    assert k_pad == k_pad2
    grid = (m_pad // tm, n_pad // tn, k_pad // tk)

    # Refetch-aware HBM traffic: x is re-read once per N-block, W once per
    # M-block, the output is written once.
    cost = pl.CostEstimate(
        flops=2 * m_pad * n_pad * k_pad,
        transcendentals=0,
        bytes_accessed=4 * (m_pad * k_pad * grid[1]
                            + k_pad * n_pad * grid[0]
                            + m_pad * n_pad),
    )

    return pl.pallas_call(
        functools.partial(_linear_kernel, precision=precision),
        out_shape=jax.ShapeDtypeStruct((m_pad, n_pad), jnp.float32),
        grid_spec=pltpu.PrefetchScalarGridSpec(
            num_scalar_prefetch=0,
            grid=grid,
            in_specs=[
                pl.BlockSpec((tm, tk), lambda i, j, k: (i, k)),  # activations
                pl.BlockSpec((tk, tn), lambda i, j, k: (k, j)),  # weight (IN,OUT)
            ],
            out_specs=pl.BlockSpec((tm, tn), lambda i, j, k: (i, j)),
        ),
        compiler_params=pltpu.CompilerParams(
            dimension_semantics=("parallel", "parallel", "arbitrary"),
            # Fits 512x1024-class double-buffered tiles; safe on every
            # generation (v5e/v6e: 128 MiB physical VMEM, v7x: 64 MiB per TC).
            vmem_limit_bytes=48 * 1024 * 1024,
        ),
        cost_estimate=cost,
    )(x_p, w_t_p)


@functools.partial(jax.jit,
                   static_argnames=("out_cols", "tm", "tn", "tk", "precision"))
def _linear_impl(x, w_t, *, out_cols, tm, tn, tk, precision):
    batch, in_dim = x.shape
    k_pad, n_pad = w_t.shape
    m_pad = _round_up(batch, tm)

    x = x.astype(jnp.float32)
    if (m_pad, k_pad) != (batch, in_dim):
        # K padding is zeros -> contributes 0 to the dot; M padding sliced off.
        x = jnp.pad(x, ((0, m_pad - batch), (0, k_pad - in_dim)))

    out = _pallas_matmul(x, w_t, tm=tm, tn=tn, tk=tk, precision=precision)

    if (m_pad, n_pad) != (batch, out_cols):
        out = out[:batch, :out_cols]
    return out


def make_linear(weight, *, tm_max=512, tn_max=512, tk_max=1024,
                precision=jax.lax.Precision.HIGHEST):
    """Build a forward(x) closure matching torch.nn.Linear(bias=False).

    The weight is cast / transposed to (IN, OUT) / padded exactly once here
    and cached across forward calls.
    """
    weight = jnp.asarray(weight)
    out_dim, in_dim = weight.shape
    small_w = (out_dim <= tn_max) and (in_dim <= tk_max)

    # ---- one-time weight prep (cached) ----
    w_t = jnp.asarray(weight, jnp.float32).T              # (IN, OUT)
    n_pad = _round_up(out_dim, 128)
    k_pad = _round_up(in_dim, 128)
    if (k_pad, n_pad) != (in_dim, out_dim):
        w_t_pad = jnp.pad(w_t, ((0, k_pad - in_dim), (0, n_pad - out_dim)))
    else:
        w_t_pad = w_t

    tn0 = _pick_tile(n_pad, tn_max, 128)
    tk0 = _pick_tile(k_pad, tk_max, 128)

    def forward(x):
        lead = x.shape[:-1]
        x2d = x if x.ndim == 2 else x.reshape((-1, x.shape[-1]))
        batch = x2d.shape[0]

        if small_w and batch <= tm_max:
            # Single-block fast path: full-array blocks (legal below (8,128));
            # no padding, no slicing, no extra HBM copies around the kernel.
            out = _linear_impl(x2d, w_t, out_cols=out_dim,
                               tm=batch, tn=out_dim, tk=in_dim,
                               precision=precision)
        else:
            m_pad = _round_up(batch, 8)
            tm = _pick_tile(m_pad, tm_max, 8)
            tn, tk = tn0, tk0
            if m_pad // tm == 1 and n_pad // tn == 1:
                # Keep >=2 blocks along a "parallel" grid axis so the two
                # v7x TensorCores both get work.
                if n_pad >= 2 * 128:
                    tn = _pick_tile(n_pad, n_pad // 2, 128)
                elif m_pad >= 2 * 8:
                    tm = _pick_tile(m_pad, m_pad // 2, 8)
            out = _linear_impl(x2d, w_t_pad, out_cols=out_dim,
                               tm=tm, tn=tn, tk=tk, precision=precision)

        return out if x.ndim == 2 else out.reshape(lead + (out_dim,))

    return forward


def linear_forward(x, weight, **kwargs):
    """One-shot convenience wrapper: y = x @ weight.T (no bias)."""
    return make_linear(weight, **kwargs)(x)


if __name__ == "__main__":
    # Small shapes consistent with the module: Net(input_dim, output_dim).
    batch, input_dim, output_dim = 2, 32, 16

    key = jax.random.PRNGKey(0)
    k_x, k_w = jax.random.split(key)

    # Deterministic init mirroring torch.nn.Linear default:
    # U(-1/sqrt(input_dim), 1/sqrt(input_dim)).
    bound = 1.0 / (input_dim ** 0.5)
    weight = jax.random.uniform(k_w, (output_dim, input_dim), jnp.float32,
                                -bound, bound)
    x = jax.random.normal(k_x, (batch, input_dim), jnp.float32)

    net = make_linear(weight)
    y = net(x)
    jax.block_until_ready(y)

    y_ref = jnp.dot(x, weight.T, precision=jax.lax.Precision.HIGHEST)
    assert y.shape == (batch, output_dim)
    assert jnp.allclose(y, y_ref, atol=1e-5, rtol=1e-5)

    # Larger multi-tile problem: exercises padding, divisor tiles, the
    # >=2-parallel-block heuristic and the K-axis accumulation path.
    k_x2, k_w2 = jax.random.split(jax.random.PRNGKey(1))
    x2 = jax.random.normal(k_x2, (300, 1100), jnp.float32)
    w2 = jax.random.normal(k_w2, (270, 1100), jnp.float32) * 0.01
    net2 = make_linear(w2)
    y2 = net2(x2)
    jax.block_until_ready(y2)
    y2_ref = jnp.dot(x2, w2.T, precision=jax.lax.Precision.HIGHEST)
    assert y2.shape == (300, 270)
    assert jnp.allclose(y2, y2_ref, atol=1e-3, rtol=1e-3)

    print("KERNEL_OK")
</pallas_src>

<mosaic_0001>
module attributes {stable_mosaic.version = 11 : i64} {
  func.func @_linear_kernel(%arg0: i32, %arg1: i32, %arg2: i32, %arg3: memref<2x32xf32, #tpu.memory_space<vmem>>, %arg4: memref<32x16xf32, #tpu.memory_space<vmem>>, %arg5: memref<2x16xf32, #tpu.memory_space<vmem>>) attributes {dimension_semantics = [#tpu.dimension_semantics<parallel>, #tpu.dimension_semantics<parallel>, #tpu.dimension_semantics<arbitrary>], iteration_bounds = array<i64: 1, 1, 1>, scalar_prefetch = 0 : i64, scratch_operands = 0 : i64, tpu.core_type = #tpu.core_type<tc>, window_params = [{transform_indices = @transform_0, window_bounds = array<i64: 2, 32>}, {transform_indices = @transform_1, window_bounds = array<i64: 32, 16>}, {transform_indices = @transform_2, window_bounds = array<i64: 2, 16>}]} {
    %c0_i32 = arith.constant 0 : i32
    %0 = arith.cmpi eq, %arg2, %c0_i32 : i32
    %1 = arith.extui %0 : i1 to i32
    %c0_i32_0 = arith.constant 0 : i32
    %2 = arith.cmpi ne, %1, %c0_i32_0 : i32
    scf.if %2 {
      %cst_8 = arith.constant 0.000000e+00 : f32
      %9 = vector.broadcast %cst_8 : f32 to vector<2x16xf32>
      %c0_9 = arith.constant 0 : index
      %c0_10 = arith.constant 0 : index
      %10 = vector.load %arg5[%c0_9, %c0_10] : memref<2x16xf32, #tpu.memory_space<vmem>>, vector<2x16xf32>
      tpu.vector_store %arg5[%c0_9, %c0_10], %9 {strides = array<i32>} : memref<2x16xf32, #tpu.memory_space<vmem>>, vector<2x16xf32>,
    } else {
    }
    %c0 = arith.constant 0 : index
    %c0_1 = arith.constant 0 : index
    %3 = vector.load %arg5[%c0, %c0_1] : memref<2x16xf32, #tpu.memory_space<vmem>>, vector<2x16xf32>
    %c0_2 = arith.constant 0 : index
    %c0_3 = arith.constant 0 : index
    %4 = vector.load %arg3[%c0_2, %c0_3] : memref<2x32xf32, #tpu.memory_space<vmem>>, vector<2x32xf32>
    %c0_4 = arith.constant 0 : index
    %c0_5 = arith.constant 0 : index
    %5 = vector.load %arg4[%c0_4, %c0_5] : memref<32x16xf32, #tpu.memory_space<vmem>>, vector<32x16xf32>
    %cst = arith.constant dense<0.000000e+00> : vector<2x16xf32>
    %6 = tpu.matmul %4, %5, %cst {dimension_numbers = #tpu.dot_dimension_numbers<[1], [0], [0], [1], [0, 0, 1, 1], [], []>, precision = #tpu.contract_precision<fp32>} : vector<2x32xf32>, vector<32x16xf32>, vector<2x16xf32> -> vector<2x16xf32>
    %7 = arith.addf %3, %6 : vector<2x16xf32>
    %c0_6 = arith.constant 0 : index
    %c0_7 = arith.constant 0 : index
    %8 = vector.load %arg5[%c0_6, %c0_7] : memref<2x16xf32, #tpu.memory_space<vmem>>, vector<2x16xf32>
    tpu.vector_store %arg5[%c0_6, %c0_7], %7 {strides = array<i32>} : memref<2x16xf32, #tpu.memory_space<vmem>>, vector<2x16xf32>,
    return
  }
  func.func @transform_0(%arg0: i32, %arg1: i32, %arg2: i32) -> (i32, i32) {
    %c0_i32 = arith.constant 0 : i32
    return %arg0, %arg2 : i32, i32
  }
  func.func @transform_1(%arg0: i32, %arg1: i32, %arg2: i32) -> (i32, i32) {
    %c0_i32 = arith.constant 0 : i32
    return %arg2, %arg1 : i32, i32
  }
  func.func @transform_2(%arg0: i32, %arg1: i32, %arg2: i32) -> (i32, i32) {
    %c0_i32 = arith.constant 0 : i32
    return %arg0, %arg1 : i32, i32
  }
}

</mosaic_0001>

<llo_original>
// kernel: _linear_impl.1
$region0: #{_linear_impl.1}
  #allocation0 [shape = 'u32[]', space=smem, size = 0x4, offset = 0x4, fixed_abs, tag = 'smem constant byte address 0x4 - core index']
  #allocation1 [shape = 'u32[72,128]{1,0:T(1,128)}', space=vmem, size = 0x9000, scoped, tag = 'internal scratch']
  %s0 = inlined_call_operand.vmem [shape: f32[2,32], index: 0, kind: input, shape index: {}]
  %s1 = inlined_call_operand.vmem [shape: f32[32,16], index: 1, kind: input, shape index: {}]
  %s2 = inlined_call_operand.hbm [shape: f32[2,16], index: 2, kind: output, shape index: {}]
  %s3 = sld [smem:[#allocation0]]
  $region22: #{_linear_impl.1} parent=0
    _
  %s5 = ssub.s32 1, %s3
  %s6 = scalar_select 0, %s5, %s3
  $region1: #{_linear_impl.1} parent=0
    #allocation2 [shape = 'u8[1024]{0}', space=vmem, size = 0x400, scoped, tag = 'output window, operand 0, single buffered']
    #allocation3 [shape = 's32[1]{0}', space=sflag, size = 0x4, scoped, tag = 'scoped memory for _linear_impl.1']
    %7 = vsyncpa [#allocation3], 0
    // Predicated region
    $region2: #{_linear_impl.1} parent=1 // pred_check
      _
    $region3: #{_linear_impl.1} parent=1 // pred_check_branch
      %9 = sbr.rel (0) target = $region5
    $region4: #{_linear_impl.1} parent=1 // pred_region
      _
    $region5: #{_linear_impl.1} parent=1 // pred_fallthru
      _
    // Predicated region
    $region6: #{_linear_impl.1} parent=1 // pred_check
      _
    $region7: #{_linear_impl.1} parent=1 // pred_check_branch
      %11 = sbr.rel (0) target = $region9
    $region8: #{_linear_impl.1} parent=1 // pred_region
      _
    $region9: #{_linear_impl.1} parent=1 // pred_fallthru
      _
    %p12 = scmp.eq.s32.totalorder 0, 0
    // Predicated region
    $region10: #{_linear_impl.1} parent=1 // pred_check
      %p13 = pneg %p12
    $region11: #{_linear_impl.1} parent=1 // pred_check_branch
      %15 = sbr.rel (%p13) target = $region13
    $region12: #{_linear_impl.1} parent=1 // pred_region
      %vm16 = vcmask 123904
      %17 = vst.msk [vmem:[#allocation2] sm:$0x3] %vm16, 0.0
    $region13: #{_linear_impl.1} parent=1 // pred_fallthru
      _
    %v18 = vld [vmem:[#allocation2] sm:$0x3]
    %v19 = vld [vmem:[%s0] sm:$0x3]
    %v20 = vld [vmem:[%s1] sm:$0xff]
    %v21 = vld [vmem:[%s1 + $0x8] sm:$0xff]
    %v22 = vld [vmem:[%s1 + $0x10] sm:$0xff]
    %v23 = vld [vmem:[%s1 + $0x18] sm:$0xff]
    %vm24 = vcmask 261120
    %v26 = vsel %vm24, %v19, 0
    %28 = vmatpush.msra.mxu0 0.0
    %29 = vmatpush.msra.mxu0 0.0
    %30 = vmatpush.msra.mxu0 0.0
    %31 = vmatpush.msra.mxu0 0.0
    %32 = vmatpush.msra.mxu0 0.0
    %33 = vmatpush.msra.mxu0 0.0
    %34 = vmatpush.msra.mxu0 0.0
    %35 = vmatpush.msra.mxu0 0.0
    %36 = vmatpush.msra.mxu0 0.0
    %37 = vmatpush.msra.mxu0 0.0
    %38 = vmatpush.msra.mxu0 0.0
    %39 = vmatpush.msra.mxu0 0.0
    %v40 = vand.u32 %v23, 4294901760
    %41 = vmatpush.msra.mxu0 %v40
    %v42 = vand.u32 %v22, 4294901760
    %43 = vmatpush.msra.mxu0 %v42
    %v44 = vand.u32 %v21, 4294901760
    %45 = vmatpush.msra.mxu0 %v44
    %v46 = vand.u32 %v20, 4294901760
    %47 = vmatpush.msra.mxu0 %v46
    %v48 = vand.u32 %v26, 4294901760
    %v49 = vsub.f32 %v26, %v48
    %v50 = vand.u32 %v49, 4294901760
    %v51 = vsub.f32 %v49, %v50
    %v52 = vand.u32 %v51, 4294901760
    %53 = vmatmul.f32.gmra.mxu0 %v52
    %v54 = vpop.f32.mrf.mxu0
    %v55 = vadd.f32 0.0, %v54
    %56 = vdwg.mxu0
    %57 = vmatpush.msra.mxu0 0.0
    %58 = vmatpush.msra.mxu0 0.0
    %59 = vmatpush.msra.mxu0 0.0
    %60 = vmatpush.msra.mxu0 0.0
    %61 = vmatpush.msra.mxu0 0.0
    %62 = vmatpush.msra.mxu0 0.0
    %63 = vmatpush.msra.mxu0 0.0
    %64 = vmatpush.msra.mxu0 0.0
    %65 = vmatpush.msra.mxu0 0.0
    %66 = vmatpush.msra.mxu0 0.0
    %67 = vmatpush.msra.mxu0 0.0
    %68 = vmatpush.msra.mxu0 0.0
    %v69 = vand.u32 %v23, 4294901760
    %v70 = vsub.f32 %v23, %v69
    %v71 = vand.u32 %v70, 4294901760
    %v72 = vsub.f32 %v70, %v71
    %v73 = vand.u32 %v72, 4294901760
    %74 = vmatpush.msra.mxu0 %v73
    %v75 = vand.u32 %v22, 4294901760
    %v76 = vsub.f32 %v22, %v75
    %v77 = vand.u32 %v76, 4294901760
    %v78 = vsub.f32 %v76, %v77
    %v79 = vand.u32 %v78, 4294901760
    %80 = vmatpush.msra.mxu0 %v79
    %v81 = vand.u32 %v21, 4294901760
    %v82 = vsub.f32 %v21, %v81
    %v83 = vand.u32 %v82, 4294901760
    %v84 = vsub.f32 %v82, %v83
    %v85 = vand.u32 %v84, 4294901760
    %86 = vmatpush.msra.mxu0 %v85
    %v87 = vand.u32 %v20, 4294901760
    %v88 = vsub.f32 %v20, %v87
    %v89 = vand.u32 %v88, 4294901760
    %v90 = vsub.f32 %v88, %v89
    %v91 = vand.u32 %v90, 4294901760
    %92 = vmatpush.msra.mxu0 %v91
    %v93 = vand.u32 %v26, 4294901760
    %94 = vmatmul.f32.gmra.mxu0 %v93
    %v95 = vpop.f32.mrf.mxu0
    %v96 = vadd.f32 %v55, %v95
    %97 = vdwg.mxu0
    %98 = vmatpush.msra.mxu0 0.0
    %99 = vmatpush.msra.mxu0 0.0
    %100 = vmatpush.msra.mxu0 0.0
    %101 = vmatpush.msra.mxu0 0.0
    %102 = vmatpush.msra.mxu0 0.0
    %103 = vmatpush.msra.mxu0 0.0
    %104 = vmatpush.msra.mxu0 0.0
    %105 = vmatpush.msra.mxu0 0.0
    %106 = vmatpush.msra.mxu0 0.0
    %107 = vmatpush.msra.mxu0 0.0
    %108 = vmatpush.msra.mxu0 0.0
    %109 = vmatpush.msra.mxu0 0.0
    %v110 = vand.u32 %v23, 4294901760
    %v111 = vsub.f32 %v23, %v110
    %112 = vmatpush.msra.mxu0 %v111
    %v113 = vand.u32 %v22, 4294901760
    %v114 = vsub.f32 %v22, %v113
    %115 = vmatpush.msra.mxu0 %v114
    %v116 = vand.u32 %v21, 4294901760
    %v117 = vsub.f32 %v21, %v116
    %118 = vmatpush.msra.mxu0 %v117
    %v119 = vand.u32 %v20, 4294901760
    %v120 = vsub.f32 %v20, %v119
    %121 = vmatpush.msra.mxu0 %v120
    %v122 = vand.u32 %v26, 4294901760
    %v123 = vsub.f32 %v26, %v122
    %124 = vmatmul.f32.gmra.mxu0 %v123
    %v125 = vpop.f32.mrf.mxu0
    %v126 = vadd.f32 %v96, %v125
    %127 = vdwg.mxu0
    %128 = vmatpush.msra.mxu0 0.0
    %129 = vmatpush.msra.mxu0 0.0
    %130 = vmatpush.msra.mxu0 0.0
    %131 = vmatpush.msra.mxu0 0.0
    %132 = vmatpush.msra.mxu0 0.0
    %133 = vmatpush.msra.mxu0 0.0
    %134 = vmatpush.msra.mxu0 0.0
    %135 = vmatpush.msra.mxu0 0.0
    %136 = vmatpush.msra.mxu0 0.0
    %137 = vmatpush.msra.mxu0 0.0
    %138 = vmatpush.msra.mxu0 0.0
    %139 = vmatpush.msra.mxu0 0.0
    %v140 = vand.u32 %v23, 4294901760
    %141 = vmatpush.msra.mxu0 %v140
    %v142 = vand.u32 %v22, 4294901760
    %143 = vmatpush.msra.mxu0 %v142
    %v144 = vand.u32 %v21, 4294901760
    %145 = vmatpush.msra.mxu0 %v144
    %v146 = vand.u32 %v20, 4294901760
    %147 = vmatpush.msra.mxu0 %v146
    %v148 = vand.u32 %v26, 4294901760
    %v149 = vsub.f32 %v26, %v148
    %v150 = vand.u32 %v149, 4294901760
    %151 = vmatmul.f32.gmra.mxu0 %v150
    %v152 = vpop.f32.mrf.mxu0
    %v153 = vadd.f32 %v126, %v152
    %154 = vdwg.mxu0
    %155 = vmatpush.msra.mxu0 0.0
    %156 = vmatpush.msra.mxu0 0.0
    %157 = vmatpush.msra.mxu0 0.0
    %158 = vmatpush.msra.mxu0 0.0
    %159 = vmatpush.msra.mxu0 0.0
    %160 = vmatpush.msra.mxu0 0.0
    %161 = vmatpush.msra.mxu0 0.0
    %162 = vmatpush.msra.mxu0 0.0
    %163 = vmatpush.msra.mxu0 0.0
    %164 = vmatpush.msra.mxu0 0.0
    %165 = vmatpush.msra.mxu0 0.0
    %166 = vmatpush.msra.mxu0 0.0
    %v167 = vand.u32 %v23, 4294901760
    %v168 = vsub.f32 %v23, %v167
    %v169 = vand.u32 %v168, 4294901760
    %170 = vmatpush.msra.mxu0 %v169
    %v171 = vand.u32 %v22, 4294901760
    %v172 = vsub.f32 %v22, %v171
    %v173 = vand.u32 %v172, 4294901760
    %174 = vmatpush.msra.mxu0 %v173
    %v175 = vand.u32 %v21, 4294901760
    %v176 = vsub.f32 %v21, %v175
    %v177 = vand.u32 %v176, 4294901760
    %178 = vmatpush.msra.mxu0 %v177
    %v179 = vand.u32 %v20, 4294901760
    %v180 = vsub.f32 %v20, %v179
    %v181 = vand.u32 %v180, 4294901760
    %182 = vmatpush.msra.mxu0 %v181
    %v183 = vand.u32 %v26, 4294901760
    %184 = vmatmul.f32.gmra.mxu0 %v183
    %v185 = vpop.f32.mrf.mxu0
    %v186 = vadd.f32 %v153, %v185
    %187 = vdwg.mxu0
    %188 = vmatpush.msra.mxu0 0.0
    %189 = vmatpush.msra.mxu0 0.0
    %190 = vmatpush.msra.mxu0 0.0
    %191 = vmatpush.msra.mxu0 0.0
    %192 = vmatpush.msra.mxu0 0.0
    %193 = vmatpush.msra.mxu0 0.0
    %194 = vmatpush.msra.mxu0 0.0
    %195 = vmatpush.msra.mxu0 0.0
    %196 = vmatpush.msra.mxu0 0.0
    %197 = vmatpush.msra.mxu0 0.0
    %198 = vmatpush.msra.mxu0 0.0
    %199 = vmatpush.msra.mxu0 0.0
    %v200 = vand.u32 %v23, 4294901760
    %201 = vmatpush.msra.mxu0 %v200
    %v202 = vand.u32 %v22, 4294901760
    %203 = vmatpush.msra.mxu0 %v202
    %v204 = vand.u32 %v21, 4294901760
    %205 = vmatpush.msra.mxu0 %v204
    %v206 = vand.u32 %v20, 4294901760
    %207 = vmatpush.msra.mxu0 %v206
    %v208 = vand.u32 %v26, 4294901760
    %209 = vmatmul.f32.gmra.mxu0 %v208
    %v210 = vpop.f32.mrf.mxu0
    %v211 = vadd.f32 %v186, %v210
    %212 = vdwg.mxu0
    %v213 = vadd.f32 %v18, %v211
    %vm214 = vcmask 123904
    %215 = vst.msk [vmem:[#allocation2] sm:$0x3] %vm214, %v213
    // Predicated region
    $region14: #{_linear_impl.1} parent=1 // pred_check
      _
    $region15: #{_linear_impl.1} parent=1 // pred_check_branch
      %217 = sbr.rel (0) target = $region17
    $region16: #{_linear_impl.1} parent=1 // pred_region
      %219 = vsyncadd [#allocation3], 0
      %s221 = sshll.u32 [#allocation2], 4
      %s222 = int_to_ptr.vmem [resolvable:$true] %s221
      %s223 = sshll.u32 %s2, 4
      %s224 = int_to_ptr.hbm [resolvable:$true] %s223
      %226 = dma.vmem_to_hbm [thread:$0]  %s222, 32, %s224, [#allocation3]
    $region17: #{_linear_impl.1} parent=1 // pred_fallthru
      _
    // Predicated region
    $region18: #{_linear_impl.1} parent=1 // pred_check
      _
    $region19: #{_linear_impl.1} parent=1 // pred_check_branch
      %228 = sbr.rel (0) target = $region21
    $region20: #{_linear_impl.1} parent=1 // pred_region
      %230 = dma.done [#allocation3], 32
    $region21: #{_linear_impl.1} parent=1 // pred_fallthru
      _
    %231 = vsyncpa [#allocation3], 1

</llo_original>
